<compile_context>
chip_gen: v6e
topology: v6e:2x2x1
jax: 0.10.0
libtpu: 0.0.40
codegen_flags: <defaults>
</compile_context>

<pallas_src>
import functools
import math

import jax
import jax.numpy as jnp
from jax.experimental import pallas as pl
from jax.experimental.pallas import tpu as pltpu


_LANE = 128      # vreg lane width (last dim)
_SUBLANE = 8     # f32 sublane tiling (second-to-last dim)


def _round_up(v, m):
    return ((v + m - 1) // m) * m


def _pick_tile_n(n8, max_tile_n):
    """Pick a batch tile that is a sublane multiple, <= max_tile_n, and (when the
    batch is large enough) yields >= 2 grid steps so v7x megacore gets both TCs."""
    if n8 <= 2 * _SUBLANE:
        return n8
    half = _round_up((n8 + 1) // 2, _SUBLANE)
    return max(_SUBLANE, min(max_tile_n, half, n8))


def _fused_mlp_kernel(*refs, num_layers):
    """Fused MLP forward for one batch tile.

    refs = (x_ref, w0, b0, w1, b1, ..., w_{L-1}, b_{L-1}, o_ref)

    Hidden/output feature dims are pre-padded to lane (128) multiples with zeros,
    so the math on the true sub-block is exact. Weights are bf16; accumulation is
    f32 via preferred_element_type; bias-add/ReLU run in f32 on the VPU.
    """
    x_ref = refs[0]
    o_ref = refs[-1]

    h_bf16 = x_ref[...].astype(jnp.bfloat16)
    for li in range(num_layers):
        w = refs[1 + 2 * li][...]          # bf16 (in, out_pad)
        b = refs[2 + 2 * li][...]          # f32  (1, out_pad) -> broadcasts on VPU
        acc = jnp.dot(h_bf16, w, preferred_element_type=jnp.float32) + b
        if li < num_layers - 1:            # ReLU on every layer except the output layer
            acc = jnp.maximum(acc, 0.0)
            h_bf16 = acc.astype(jnp.bfloat16)
        else:
            h_bf16 = acc                   # final layer result stays f32
        # TODO(synk): nn.Dropout is identity here (eval-mode forward only).
    o_ref[...] = h_bf16.astype(o_ref.dtype)


def fused_mlp_forward(x_flat, padded_params, *, max_tile_n=1024):
    """Run the whole MLP in one pallas_call, tiled (and parallel) over batch."""
    n, d_in = x_flat.shape
    dout_pad = padded_params[0 if len(padded_params) == 0 else -1][0].shape[1]
    num_layers = len(padded_params)

    # Batch tiling: multiple of the f32 sublane (8).
    n8 = _round_up(max(n, 1), _SUBLANE)
    tile_n = _pick_tile_n(n8, max_tile_n)
    n_pad = _round_up(n8, tile_n)

    # Pad only batch rows (padded rows are sliced off afterwards; their values are
    # never consumed). Feature dim stays unpadded -> no host-side 4x inflation.
    x_p = jnp.pad(x_flat.astype(jnp.float32), ((0, n_pad - n), (0, 0)))

    in_specs = [pl.BlockSpec((tile_n, d_in), lambda i: (i, 0))]
    inputs = [x_p]
    weight_bytes = 0
    flops = 0
    for (w, b) in padded_params:
        # Constant block index -> weights/biases are DMA'd once and stay
        # resident in VMEM across all batch tiles.
        in_specs.append(pl.BlockSpec(w.shape, lambda i: (0, 0)))
        in_specs.append(pl.BlockSpec(b.shape, lambda i: (0, 0)))
        inputs.append(w)
        inputs.append(b)
        weight_bytes += w.size * w.dtype.itemsize + b.size * b.dtype.itemsize
        flops += 2 * n_pad * w.shape[0] * w.shape[1]

    bytes_accessed = (x_p.size * 4) + (n_pad * dout_pad * 4) + weight_bytes
    cost = pl.CostEstimate(flops=flops, transcendentals=0,
                           bytes_accessed=bytes_accessed)

    kernel = functools.partial(_fused_mlp_kernel, num_layers=num_layers)
    out = pl.pallas_call(
        kernel,
        out_shape=jax.ShapeDtypeStruct((n_pad, dout_pad), jnp.float32),
        grid=(n_pad // tile_n,),
        in_specs=in_specs,
        out_specs=pl.BlockSpec((tile_n, dout_pad), lambda i: (i, 0)),
        compiler_params=pltpu.CompilerParams(
            dimension_semantics=("parallel",),   # shards batch tiles across TCs (v7x)
        ),
        cost_estimate=cost,
    )(*inputs)
    return out, n


class MLPDecoderPallas:
    """JAX/Pallas re-implementation of MLPDecoder's forward pass."""

    def __init__(self, model_configs, key):
        self.input_height = model_configs["input_height"]
        self.input_width = model_configs["input_width"]
        self.input_channels = model_configs["input_channels"]
        self.output_size = (
            self.input_height * self.input_width * self.input_channels
        )
        input_size = model_configs["mir_configs"]["feature_dims"]
        layers = model_configs["hidden_layers"]
        dropout_probas = model_configs["dropout_probabilities"]
        assert len(dropout_probas) == len(layers)

        # Layer sizes exactly as in the PyTorch module:
        #   Linear(input_size, layers[0]) + ReLU
        #   [Linear(layers[i], layers[i+1]) + ReLU + Dropout] for i in range(len(layers)-1)
        #   Linear(layers[-1], output_size)
        dims = [input_size] + list(layers) + [self.output_size]

        # Weights stored bf16 with output (and, for non-first layers, input) dims
        # zero-padded to lane multiples; biases f32 (1, out_pad). The first layer's
        # input dim is left unpadded so x needs no host-side feature padding.
        self.params = []
        for i in range(len(dims) - 1):
            key, wk, bk = jax.random.split(key, 3)
            fan_in = dims[i]
            bound = 1.0 / math.sqrt(fan_in)
            w = jax.random.uniform(
                wk, (dims[i], dims[i + 1]), jnp.float32, minval=-bound, maxval=bound
            )
            b = jax.random.uniform(
                bk, (dims[i + 1],), jnp.float32, minval=-bound, maxval=bound
            )
            in_pad = dims[i] if i == 0 else _round_up(dims[i], _LANE)
            out_pad = _round_up(dims[i + 1], _LANE)
            w_p = (
                jnp.zeros((in_pad, out_pad), jnp.float32)
                .at[: dims[i], : dims[i + 1]]
                .set(w)
                .astype(jnp.bfloat16)
            )
            b_p = jnp.zeros((1, out_pad), jnp.float32).at[0, : dims[i + 1]].set(b)
            self.params.append((w_p, b_p))
        self.num_layers = len(self.params)

    def __call__(self, x):
        # nn.Flatten(): flatten everything except the batch axis.
        n = x.shape[0]
        h = x.reshape(n, -1)
        out_padded, n_true = fused_mlp_forward(h, self.params)
        out = out_padded[:n_true, : self.output_size]
        # out.view((-1, C, H, W))
        return out.reshape(
            -1, self.input_channels, self.input_height, self.input_width
        )


if __name__ == "__main__":
    model_configs = {
        "input_height": 16,
        "input_width": 16,
        "input_channels": 4,
        "mir_configs": {"feature_dims": 32},
        "hidden_layers": [64, 64],
        "dropout_probabilities": [0.0, 0.0],
    }

    key = jax.random.PRNGKey(0)
    key, init_key, x_key = jax.random.split(key, 3)

    model = MLPDecoderPallas(model_configs, init_key)

    batch = 2
    x = jax.random.normal(
        x_key,
        (batch, model_configs["mir_configs"]["feature_dims"]),
        dtype=jnp.float32,
    )

    out = model(x)
    out = jax.block_until_ready(out)

    expected_shape = (
        batch,
        model_configs["input_channels"],
        model_configs["input_height"],
        model_configs["input_width"],
    )
    assert out.shape == expected_shape, (out.shape, expected_shape)
    assert out.dtype == jnp.float32
    assert bool(jnp.all(jnp.isfinite(out)))

    print("KERNEL_OK")
</pallas_src>

<mosaic_0001>
module attributes {stable_mosaic.version = 11 : i64} {
  func.func @_fused_mlp_kernel(%arg0: i32, %arg1: memref<8x32xf32, #tpu.memory_space<vmem>>, %arg2: memref<32x128xbf16, #tpu.memory_space<vmem>>, %arg3: memref<1x128xf32, #tpu.memory_space<vmem>>, %arg4: memref<128x128xbf16, #tpu.memory_space<vmem>>, %arg5: memref<1x128xf32, #tpu.memory_space<vmem>>, %arg6: memref<128x1024xbf16, #tpu.memory_space<vmem>>, %arg7: memref<1x1024xf32, #tpu.memory_space<vmem>>, %arg8: memref<8x1024xf32, #tpu.memory_space<vmem>>) attributes {dimension_semantics = [#tpu.dimension_semantics<parallel>], iteration_bounds = array<i64: 1>, scalar_prefetch = 0 : i64, scratch_operands = 0 : i64, tpu.core_type = #tpu.core_type<tc>, window_params = [{transform_indices = @transform_0, window_bounds = array<i64: 8, 32>}, {pipeline_mode = #tpu.pipeline_mode<synchronous>, transform_indices = @transform_1, window_bounds = array<i64: 32, 128>}, {pipeline_mode = #tpu.pipeline_mode<synchronous>, transform_indices = @transform_2, window_bounds = array<i64: 1, 128>}, {pipeline_mode = #tpu.pipeline_mode<synchronous>, transform_indices = @transform_3, window_bounds = array<i64: 128, 128>}, {pipeline_mode = #tpu.pipeline_mode<synchronous>, transform_indices = @transform_4, window_bounds = array<i64: 1, 128>}, {pipeline_mode = #tpu.pipeline_mode<synchronous>, transform_indices = @transform_5, window_bounds = array<i64: 128, 1024>}, {pipeline_mode = #tpu.pipeline_mode<synchronous>, transform_indices = @transform_6, window_bounds = array<i64: 1, 1024>}, {transform_indices = @transform_7, window_bounds = array<i64: 8, 1024>}]} {
    %c0 = arith.constant 0 : index
    %c0_0 = arith.constant 0 : index
    %0 = vector.load %arg1[%c0, %c0_0] : memref<8x32xf32, #tpu.memory_space<vmem>>, vector<8x32xf32>
    %1 = arith.truncf %0 : vector<8x32xf32> to vector<8x32xbf16>
    %c0_1 = arith.constant 0 : index
    %c0_2 = arith.constant 0 : index
    %2 = vector.load %arg2[%c0_1, %c0_2] : memref<32x128xbf16, #tpu.memory_space<vmem>>, vector<32x128xbf16>
    %c0_3 = arith.constant 0 : index
    %c0_4 = arith.constant 0 : index
    %3 = vector.load %arg3[%c0_3, %c0_4] : memref<1x128xf32, #tpu.memory_space<vmem>>, vector<1x128xf32>
    %cst = arith.constant dense<0.000000e+00> : vector<8x128xf32>
    %4 = tpu.matmul %1, %2, %cst {dimension_numbers = #tpu.dot_dimension_numbers<[1], [0], [0], [1], [0, 0, 1, 1], [], []>} : vector<8x32xbf16>, vector<32x128xbf16>, vector<8x128xf32> -> vector<8x128xf32>
    %5 = vector.broadcast %3 : vector<1x128xf32> to vector<8x128xf32>
    %6 = arith.addf %4, %5 : vector<8x128xf32>
    %cst_5 = arith.constant 0.000000e+00 : f32
    %7 = vector.broadcast %cst_5 : f32 to vector<8x128xf32>
    %8 = arith.maximumf %6, %7 : vector<8x128xf32>
    %9 = arith.truncf %8 : vector<8x128xf32> to vector<8x128xbf16>
    %c0_6 = arith.constant 0 : index
    %c0_7 = arith.constant 0 : index
    %10 = vector.load %arg4[%c0_6, %c0_7] : memref<128x128xbf16, #tpu.memory_space<vmem>>, vector<128x128xbf16>
    %c0_8 = arith.constant 0 : index
    %c0_9 = arith.constant 0 : index
    %11 = vector.load %arg5[%c0_8, %c0_9] : memref<1x128xf32, #tpu.memory_space<vmem>>, vector<1x128xf32>
    %cst_10 = arith.constant dense<0.000000e+00> : vector<8x128xf32>
    %12 = tpu.matmul %9, %10, %cst_10 {dimension_numbers = #tpu.dot_dimension_numbers<[1], [0], [0], [1], [0, 0, 1, 1], [], []>} : vector<8x128xbf16>, vector<128x128xbf16>, vector<8x128xf32> -> vector<8x128xf32>
    %13 = vector.broadcast %11 : vector<1x128xf32> to vector<8x128xf32>
    %14 = arith.addf %12, %13 : vector<8x128xf32>
    %cst_11 = arith.constant 0.000000e+00 : f32
    %15 = vector.broadcast %cst_11 : f32 to vector<8x128xf32>
    %16 = arith.maximumf %14, %15 : vector<8x128xf32>
    %17 = arith.truncf %16 : vector<8x128xf32> to vector<8x128xbf16>
    %c0_12 = arith.constant 0 : index
    %c0_13 = arith.constant 0 : index
    %18 = vector.load %arg6[%c0_12, %c0_13] : memref<128x1024xbf16, #tpu.memory_space<vmem>>, vector<128x1024xbf16>
    %c0_14 = arith.constant 0 : index
    %c0_15 = arith.constant 0 : index
    %19 = vector.load %arg7[%c0_14, %c0_15] : memref<1x1024xf32, #tpu.memory_space<vmem>>, vector<1x1024xf32>
    %cst_16 = arith.constant dense<0.000000e+00> : vector<8x1024xf32>
    %20 = tpu.matmul %17, %18, %cst_16 {dimension_numbers = #tpu.dot_dimension_numbers<[1], [0], [0], [1], [0, 0, 1, 1], [], []>} : vector<8x128xbf16>, vector<128x1024xbf16>, vector<8x1024xf32> -> vector<8x1024xf32>
    %21 = vector.broadcast %19 : vector<1x1024xf32> to vector<8x1024xf32>
    %22 = arith.addf %20, %21 : vector<8x1024xf32>
    %c0_17 = arith.constant 0 : index
    %c0_18 = arith.constant 0 : index
    %23 = vector.load %arg8[%c0_17, %c0_18] : memref<8x1024xf32, #tpu.memory_space<vmem>>, vector<8x1024xf32>
    tpu.vector_store %arg8[%c0_17, %c0_18], %22 {strides = array<i32>} : memref<8x1024xf32, #tpu.memory_space<vmem>>, vector<8x1024xf32>,
    return
  }
  func.func @transform_0(%arg0: i32) -> (i32, i32) {
    %c0_i32 = arith.constant 0 : i32
    %c0_i32_0 = arith.constant 0 : i32
    return %arg0, %c0_i32 : i32, i32
  }
  func.func @transform_1(%arg0: i32) -> (i32, i32) {
    %c0_i32 = arith.constant 0 : i32
    %c0_i32_0 = arith.constant 0 : i32
    %c0_i32_1 = arith.constant 0 : i32
    return %c0_i32, %c0_i32_0 : i32, i32
  }
  func.func @transform_2(%arg0: i32) -> (i32, i32) {
    %c0_i32 = arith.constant 0 : i32
    %c0_i32_0 = arith.constant 0 : i32
    %c0_i32_1 = arith.constant 0 : i32
    return %c0_i32, %c0_i32_0 : i32, i32
  }
  func.func @transform_3(%arg0: i32) -> (i32, i32) {
    %c0_i32 = arith.constant 0 : i32
    %c0_i32_0 = arith.constant 0 : i32
    %c0_i32_1 = arith.constant 0 : i32
    return %c0_i32, %c0_i32_0 : i32, i32
  }
  func.func @transform_4(%arg0: i32) -> (i32, i32) {
    %c0_i32 = arith.constant 0 : i32
    %c0_i32_0 = arith.constant 0 : i32
    %c0_i32_1 = arith.constant 0 : i32
    return %c0_i32, %c0_i32_0 : i32, i32
  }
  func.func @transform_5(%arg0: i32) -> (i32, i32) {
    %c0_i32 = arith.constant 0 : i32
    %c0_i32_0 = arith.constant 0 : i32
    %c0_i32_1 = arith.constant 0 : i32
    return %c0_i32, %c0_i32_0 : i32, i32
  }
  func.func @transform_6(%arg0: i32) -> (i32, i32) {
    %c0_i32 = arith.constant 0 : i32
    %c0_i32_0 = arith.constant 0 : i32
    %c0_i32_1 = arith.constant 0 : i32
    return %c0_i32, %c0_i32_0 : i32, i32
  }
  func.func @transform_7(%arg0: i32) -> (i32, i32) {
    %c0_i32 = arith.constant 0 : i32
    %c0_i32_0 = arith.constant 0 : i32
    return %arg0, %c0_i32 : i32, i32
  }
}

</mosaic_0001>

<llo_original>
// kernel: tpu_custom_call.1
$region0: #{tpu_custom_call.1}
  #allocation0 [shape = 'u32[]', space=smem, size = 0x4, offset = 0x4, fixed_abs, tag = 'smem constant byte address 0x4 - core index']
  #allocation1 [shape = 'u32[144,128]{1,0:T(1,128)}', space=vmem, size = 0x12000, scoped, tag = 'internal scratch']
  %s0 = inlined_call_operand.hbm [shape: f32[8,32], index: 0, kind: input, shape index: {}]
  %s1 = inlined_call_operand.hbm [shape: bf16[32,128], index: 1, kind: input, shape index: {}]
  %s2 = inlined_call_operand.vmem [shape: f32[1,128], index: 2, kind: input, shape index: {}]
  %s3 = inlined_call_operand.hbm [shape: bf16[128,128], index: 3, kind: input, shape index: {}]
  %s4 = inlined_call_operand.vmem [shape: f32[1,128], index: 4, kind: input, shape index: {}]
  %s5 = inlined_call_operand.hbm [shape: bf16[128,1024], index: 5, kind: input, shape index: {}]
  %s6 = inlined_call_operand.vmem [shape: f32[1,1024], index: 6, kind: input, shape index: {}]
  %s7 = inlined_call_operand.hbm [shape: f32[8,1024], index: 7, kind: output, shape index: {}]
  %s8 = sld [smem:[#allocation0]]
  $region54: #{tpu_custom_call.1} parent=0
    _
  %s10 = ssub.s32 1, %s8
  %s11 = scalar_select 0, %s10, %s8
  $region1: #{tpu_custom_call.1} parent=0
    #allocation2 [shape = 'u8[4096]{0}', space=vmem, size = 0x1000, scoped, tag = 'input window, operand 0, single buffered']
    #allocation3 [shape = 's32[1]{0}', space=sflag, size = 0x4, scoped, tag = 'scoped memory for tpu_custom_call.1']
    #allocation4 [shape = 's32[1]{0}', space=sflag, size = 0x4, scoped, tag = 'scoped memory for tpu_custom_call.1']
    #allocation5 [shape = 'u8[8192]{0}', space=vmem, size = 0x2000, scoped, tag = 'input window, operand 1, single buffered']
    #allocation6 [shape = 's32[1]{0}', space=sflag, size = 0x4, scoped, tag = 'scoped memory for tpu_custom_call.1']
    #allocation7 [shape = 'u8[32768]{0}', space=vmem, size = 0x8000, scoped, tag = 'input window, operand 3, single buffered']
    #allocation8 [shape = 'u8[262144]{0}', space=vmem, size = 0x40000, scoped, tag = 'input window, operand 5, single buffered']
    #allocation9 [shape = 's32[1]{0}', space=sflag, size = 0x4, scoped, tag = 'scoped memory for tpu_custom_call.1']
    #allocation10 [shape = 'u8[32768]{0}', space=vmem, size = 0x8000, scoped, tag = 'output window, operand 0, single buffered']
    %12 = vsyncpa [#allocation3], 0
    %13 = vsyncpa [#allocation6], 0
    %14 = vsyncpa [#allocation9], 0
    %15 = vsyncpa [#allocation4], 0
    // Predicated region
    $region2: #{tpu_custom_call.1} parent=1 // pred_check
      _
    $region3: #{tpu_custom_call.1} parent=1 // pred_check_branch
      %17 = sbr.rel (0) target = $region5
    $region4: #{tpu_custom_call.1} parent=1 // pred_region
      %s19 = ssub.s32 128, 128
      %20 = vsyncadd [#allocation3], %s19
      %s22 = sshll.u32 [#allocation2], 4
      %s23 = int_to_ptr.vmem [resolvable:$true] %s22
      %25 = dma.hbm_to_vmem [thread:$0]  %s0, 128, %s23, [#allocation3]
    $region5: #{tpu_custom_call.1} parent=1 // pred_fallthru
      _
    // Predicated region
    $region6: #{tpu_custom_call.1} parent=1 // pred_check
      _
    $region7: #{tpu_custom_call.1} parent=1 // pred_check_branch
      %27 = sbr.rel (0) target = $region9
    $region8: #{tpu_custom_call.1} parent=1 // pred_region
      %s29 = ssub.s32 256, 256
      %30 = vsyncadd [#allocation6], %s29
      %s31 = sshll.u32 [#allocation5], 4
      %s32 = int_to_ptr.vmem [resolvable:$true] %s31
      %37 = dma.hbm_to_vmem [thread:$0]  %s1, 256, %s32, [#allocation6], 64, 64, 4
    $region9: #{tpu_custom_call.1} parent=1 // pred_fallthru
      _
    // Predicated region
    $region10: #{tpu_custom_call.1} parent=1 // pred_check
      _
    $region11: #{tpu_custom_call.1} parent=1 // pred_check_branch
      %39 = sbr.rel (0) target = $region13
    $region12: #{tpu_custom_call.1} parent=1 // pred_region
      _
    $region13: #{tpu_custom_call.1} parent=1 // pred_fallthru
      _
    // Predicated region
    $region14: #{tpu_custom_call.1} parent=1 // pred_check
      _
    $region15: #{tpu_custom_call.1} parent=1 // pred_check_branch
      %41 = sbr.rel (0) target = $region17
    $region16: #{tpu_custom_call.1} parent=1 // pred_region
      %s43 = ssub.s32 1024, 1024
      %44 = vsyncadd [#allocation6], %s43
      %s45 = sshll.u32 [#allocation7], 4
      %s46 = int_to_ptr.vmem [resolvable:$true] %s45
      %51 = dma.hbm_to_vmem [thread:$0]  %s3, 1024, %s46, [#allocation6], 64, 64, 4
    $region17: #{tpu_custom_call.1} parent=1 // pred_fallthru
      _
    // Predicated region
    $region18: #{tpu_custom_call.1} parent=1 // pred_check
      _
    $region19: #{tpu_custom_call.1} parent=1 // pred_check_branch
      %53 = sbr.rel (0) target = $region21
    $region20: #{tpu_custom_call.1} parent=1 // pred_region
      _
    $region21: #{tpu_custom_call.1} parent=1 // pred_fallthru
      _
    // Predicated region
    $region22: #{tpu_custom_call.1} parent=1 // pred_check
      _
    $region23: #{tpu_custom_call.1} parent=1 // pred_check_branch
      %55 = sbr.rel (0) target = $region25
    $region24: #{tpu_custom_call.1} parent=1 // pred_region
      %s57 = ssub.s32 8192, 8192
      %58 = vsyncadd [#allocation9], %s57
      %s59 = sshll.u32 [#allocation8], 4
      %s60 = int_to_ptr.vmem [resolvable:$true] %s59
      %65 = dma.hbm_to_vmem [thread:$0]  %s5, 8192, %s60, [#allocation9], 512, 512, 32
    $region25: #{tpu_custom_call.1} parent=1 // pred_fallthru
      _
    // Predicated region
    $region26: #{tpu_custom_call.1} parent=1 // pred_check
      _
    $region27: #{tpu_custom_call.1} parent=1 // pred_check_branch
      %67 = sbr.rel (0) target = $region29
    $region28: #{tpu_custom_call.1} parent=1 // pred_region
      _
    $region29: #{tpu_custom_call.1} parent=1 // pred_fallthru
      _
    // Predicated region
    $region30: #{tpu_custom_call.1} parent=1 // pred_check
      _
    $region31: #{tpu_custom_call.1} parent=1 // pred_check_branch
      %69 = sbr.rel (0) target = $region33
    $region32: #{tpu_custom_call.1} parent=1 // pred_region
      %70 = dma.done [#allocation3], 128
    $region33: #{tpu_custom_call.1} parent=1 // pred_fallthru
      _
    // Predicated region
    $region34: #{tpu_custom_call.1} parent=1 // pred_check
      _
    $region35: #{tpu_custom_call.1} parent=1 // pred_check_branch
      %72 = sbr.rel (0) target = $region37
    $region36: #{tpu_custom_call.1} parent=1 // pred_region
      %73 = dma.done [#allocation6], 256
    $region37: #{tpu_custom_call.1} parent=1 // pred_fallthru
      _
    // Predicated region
    $region38: #{tpu_custom_call.1} parent=1 // pred_check
      _
    $region39: #{tpu_custom_call.1} parent=1 // pred_check_branch
      %75 = sbr.rel (0) target = $region41
    $region40: #{tpu_custom_call.1} parent=1 // pred_region
      %76 = dma.done [#allocation6], 1024
    $region41: #{tpu_custom_call.1} parent=1 // pred_fallthru
      _
    // Predicated region
    $region42: #{tpu_custom_call.1} parent=1 // pred_check
      _
    $region43: #{tpu_custom_call.1} parent=1 // pred_check_branch
      %78 = sbr.rel (0) target = $region45
    $region44: #{tpu_custom_call.1} parent=1 // pred_region
      %79 = dma.done [#allocation9], 8192
    $region45: #{tpu_custom_call.1} parent=1 // pred_fallthru
      _
    %v81 = vld [vmem:[#allocation2] sm:$0xff]
    %v82 = vpack.c.bf16 %v81, %v81
    %v83 = vld [vmem:[#allocation5] sm:$0xf]
    %v84 = vld [vmem:[#allocation5 + $0x4] sm:$0xf]
    %v85 = vld [vmem:[#allocation5 + $0x8] sm:$0xf]
    %v86 = vld [vmem:[#allocation5 + $0xc] sm:$0xf]
    %v87 = vld [vmem:[%s2] sm:$0x1]
    %v89 = vlaneseq
    %v90 = vshrl.u32 %v89, 7
    %v91 = vsub.s32 0, %v90
    %v92 = vrot.slane %v87, %v91
    %v98 = vunpack.c.l.b16 %v83
    %v99 = vunpack.c.l.b16 %v84
    %v100 = vunpack.c.l.b16 %v85
    %v101 = vunpack.c.l.b16 %v86
    %v102 = vpack.c.b16 %v99, %v98
    %v103 = vpack.c.b16 %v101, %v100
    %vm106 = vcmask 261120
    %v108 = vsel %vm106, %v82, 0
    %110 = vmatprep.subr.bf16.mxu0 0
    %111 = vmatpush1.bf16.msra.mxu0 0
    %112 = vmatprep.subr.bf16.mxu0 0
    %113 = vmatpush1.bf16.msra.mxu0 0
    %114 = vmatprep.subr.bf16.mxu0 0
    %115 = vmatpush1.bf16.msra.mxu0 0
    %116 = vmatprep.subr.bf16.mxu0 0
    %117 = vmatpush1.bf16.msra.mxu0 0
    %118 = vmatprep.subr.bf16.mxu0 0
    %119 = vmatpush1.bf16.msra.mxu0 0
    %120 = vmatprep.subr.bf16.mxu0 0
    %121 = vmatpush1.bf16.msra.mxu0 0
    %122 = vmatprep.subr.bf16.mxu0 0
    %123 = vmatpush1.bf16.msra.mxu0 %v103
    %124 = vmatprep.subr.bf16.mxu0 0
    %125 = vmatpush1.bf16.msra.mxu0 %v102
    %126 = vmatprep.subr.bf16.mxu0 0
    %127 = vmatpush2.bf16.msra.mxu0 0
    %128 = vmatprep.subr.bf16.mxu0 0
    %129 = vmatpush2.bf16.msra.mxu0 0
    %130 = vmatprep.subr.bf16.mxu0 0
    %131 = vmatpush2.bf16.msra.mxu0 0
    %132 = vmatprep.subr.bf16.mxu0 0
    %133 = vmatpush2.bf16.msra.mxu0 0
    %134 = vmatprep.subr.bf16.mxu0 0
    %135 = vmatpush2.bf16.msra.mxu0 0
    %136 = vmatprep.subr.bf16.mxu0 0
    %137 = vmatpush2.bf16.msra.mxu0 0
    %138 = vmatprep.subr.bf16.mxu0 0
    %139 = vmatpush2.bf16.msra.mxu0 0
    %140 = vmatprep.subr.bf16.mxu0 0
    %141 = vmatpush2.bf16.msra.mxu0 0
    %142 = vmatprep.mubr.bf16.mxu0 0
    %143 = vmatmul.mubr.bf16.gmra.mxu0 %v108
    %v144 = vpop.f32.mrf.mxu0
    %v145 = vadd.f32 %v92, %v144
    %v146 = vpop.f32.mrf.mxu0
    %v147 = vpop.f32.mrf.mxu0
    %v148 = vpop.f32.mrf.mxu0
    %149 = vdwg.mxu0
    %v150 = vmax.f32 %v145, 0.0
    %v151 = vpack.c.bf16 %v150, %v150
    %v152 = vld [vmem:[#allocation7] sm:$0xf]
    %v153 = vld [vmem:[#allocation7 + $0x4] sm:$0xf]
    %v154 = vld [vmem:[#allocation7 + $0x8] sm:$0xf]
    %v155 = vld [vmem:[#allocation7 + $0xc] sm:$0xf]
    %v156 = vld [vmem:[#allocation7 + $0x10] sm:$0xf]
    %v157 = vld [vmem:[#allocation7 + $0x14] sm:$0xf]
    %v158 = vld [vmem:[#allocation7 + $0x18] sm:$0xf]
    %v159 = vld [vmem:[#allocation7 + $0x1c] sm:$0xf]
    %v160 = vld [vmem:[#allocation7 + $0x20] sm:$0xf]
    %v161 = vld [vmem:[#allocation7 + $0x24] sm:$0xf]
    %v162 = vld [vmem:[#allocation7 + $0x28] sm:$0xf]
    %v163 = vld [vmem:[#allocation7 + $0x2c] sm:$0xf]
    %v164 = vld [vmem:[#allocation7 + $0x30] sm:$0xf]
    %v165 = vld [vmem:[#allocation7 + $0x34] sm:$0xf]
    %v166 = vld [vmem:[#allocation7 + $0x38] sm:$0xf]
    %v167 = vld [vmem:[#allocation7 + $0x3c] sm:$0xf]
    %v168 = vld [vmem:[%s4] sm:$0x1]
    %v170 = vlaneseq
    %v171 = vshrl.u32 %v170, 7
    %v172 = vsub.s32 0, %v171
    %v173 = vrot.slane %v168, %v172
    %v191 = vunpack.c.l.b16 %v152
    %v192 = vunpack.c.l.b16 %v153
    %v193 = vunpack.c.l.b16 %v154
    %v194 = vunpack.c.l.b16 %v155
    %v195 = vunpack.c.l.b16 %v156
    %v196 = vunpack.c.l.b16 %v157
    %v197 = vunpack.c.l.b16 %v158
    %v198 = vunpack.c.l.b16 %v159
    %v199 = vunpack.c.l.b16 %v160
    %v200 = vunpack.c.l.b16 %v161
    %v201 = vunpack.c.l.b16 %v162
    %v202 = vunpack.c.l.b16 %v163
    %v203 = vunpack.c.l.b16 %v164
    %v204 = vunpack.c.l.b16 %v165
    %v205 = vunpack.c.l.b16 %v166
    %v206 = vunpack.c.l.b16 %v167
    %v207 = vpack.c.b16 %v192, %v191
    %v208 = vpack.c.b16 %v194, %v193
    %v209 = vpack.c.b16 %v196, %v195
    %v210 = vpack.c.b16 %v198, %v197
    %v211 = vpack.c.b16 %v200, %v199
    %v212 = vpack.c.b16 %v202, %v201
    %v213 = vpack.c.b16 %v204, %v203
    %v214 = vpack.c.b16 %v206, %v205
    %223 = vmatprep.subr.bf16.mxu0 0
    %224 = vmatpush1.bf16.msra.mxu0 %v214
    %225 = vmatprep.subr.bf16.mxu0 0
    %226 = vmatpush1.bf16.msra.mxu0 %v213
    %227 = vmatprep.subr.bf16.mxu0 0
    %228 = vmatpush1.bf16.msra.mxu0 %v212
    %229 = vmatprep.subr.bf16.mxu0 0
    %230 = vmatpush1.bf16.msra.mxu0 %v211
    %231 = vmatprep.subr.bf16.mxu0 0
    %232 = vmatpush1.bf16.msra.mxu0 %v210
    %233 = vmatprep.subr.bf16.mxu0 0
    %234 = vmatpush1.bf16.msra.mxu0 %v209
    %235 = vmatprep.subr.bf16.mxu0 0
    %236 = vmatpush1.bf16.msra.mxu0 %v208
    %237 = vmatprep.subr.bf16.mxu0 0
    %238 = vmatpush1.bf16.msra.mxu0 %v207
    %239 = vmatprep.subr.bf16.mxu0 0
    %240 = vmatpush2.bf16.msra.mxu0 0
    %241 = vmatprep.subr.bf16.mxu0 0
    %242 = vmatpush2.bf16.msra.mxu0 0
    %243 = vmatprep.subr.bf16.mxu0 0
    %244 = vmatpush2.bf16.msra.mxu0 0
    %245 = vmatprep.subr.bf16.mxu0 0
    %246 = vmatpush2.bf16.msra.mxu0 0
    %247 = vmatprep.subr.bf16.mxu0 0
    %248 = vmatpush2.bf16.msra.mxu0 0
    %249 = vmatprep.subr.bf16.mxu0 0
    %250 = vmatpush2.bf16.msra.mxu0 0
    %251 = vmatprep.subr.bf16.mxu0 0
    %252 = vmatpush2.bf16.msra.mxu0 0
    %253 = vmatprep.subr.bf16.mxu0 0
    %254 = vmatpush2.bf16.msra.mxu0 0
    %255 = vmatprep.mubr.bf16.mxu0 0
    %256 = vmatmul.mubr.bf16.gmra.mxu0 %v151
    %v257 = vpop.f32.mrf.mxu0
    %v258 = vadd.f32 %v173, %v257
    %v259 = vpop.f32.mrf.mxu0
    %v260 = vpop.f32.mrf.mxu0
    %v261 = vpop.f32.mrf.mxu0
    %262 = vdwg.mxu0
    %v263 = vmax.f32 %v258, 0.0
    %v264 = vpack.c.bf16 %v263, %v263
    %v265 = vld [vmem:[#allocation8] sm:$0xff]
    %v266 = vld [vmem:[#allocation8 + $0x8] sm:$0xff]
    %v267 = vld [vmem:[#allocation8 + $0x10] sm:$0xff]
    %v268 = vld [vmem:[#allocation8 + $0x18] sm:$0xff]
    %v269 = vld [vmem:[#allocation8 + $0x20] sm:$0xff]
    %v270 = vld [vmem:[#allocation8 + $0x28] sm:$0xff]
    %v271 = vld [vmem:[#allocation8 + $0x30] sm:$0xff]
    %v272 = vld [vmem:[#allocation8 + $0x38] sm:$0xff]
    %v273 = vld [vmem:[#allocation8 + $0x40] sm:$0xff]
    %v274 = vld [vmem:[#allocation8 + $0x48] sm:$0xff]
    %v275 = vld [vmem:[#allocation8 + $0x50] sm:$0xff]
    %v276 = vld [vmem:[#allocation8 + $0x58] sm:$0xff]
    %v277 = vld [vmem:[#allocation8 + $0x60] sm:$0xff]
    %v278 = vld [vmem:[#allocation8 + $0x68] sm:$0xff]
    %v279 = vld [vmem:[#allocation8 + $0x70] sm:$0xff]
    %v280 = vld [vmem:[#allocation8 + $0x78] sm:$0xff]
    %v281 = vld [vmem:[#allocation8 + $0x80] sm:$0xff]
    %v282 = vld [vmem:[#allocation8 + $0x88] sm:$0xff]
    %v283 = vld [vmem:[#allocation8 + $0x90] sm:$0xff]
    %v284 = vld [vmem:[#allocation8 + $0x98] sm:$0xff]
    %v285 = vld [vmem:[#allocation8 + $0xa0] sm:$0xff]
    %v286 = vld [vmem:[#allocation8 + $0xa8] sm:$0xff]
    %v287 = vld [vmem:[#allocation8 + $0xb0] sm:$0xff]
    %v288 = vld [vmem:[#allocation8 + $0xb8] sm:$0xff]
    %v289 = vld [vmem:[#allocation8 + $0xc0] sm:$0xff]
    %v290 = vld [vmem:[#allocation8 + $0xc8] sm:$0xff]
    %v291 = vld [vmem:[#allocation8 + $0xd0] sm:$0xff]
    %v292 = vld [vmem:[#allocation8 + $0xd8] sm:$0xff]
    %v293 = vld [vmem:[#allocation8 + $0xe0] sm:$0xff]
    %v294 = vld [vmem:[#allocation8 + $0xe8] sm:$0xff]
    %v295 = vld [vmem:[#allocation8 + $0xf0] sm:$0xff]
    %v296 = vld [vmem:[#allocation8 + $0xf8] sm:$0xff]
    %v297 = vld [vmem:[#allocation8 + $0x100] sm:$0xff]
    %v298 = vld [vmem:[#allocation8 + $0x108] sm:$0xff]
    %v299 = vld [vmem:[#allocation8 + $0x110] sm:$0xff]
    %v300 = vld [vmem:[#allocation8 + $0x118] sm:$0xff]
    %v301 = vld [vmem:[#allocation8 + $0x120] sm:$0xff]
    %v302 = vld [vmem:[#allocation8 + $0x128] sm:$0xff]
    %v303 = vld [vmem:[#allocation8 + $0x130] sm:$0xff]
    %v304 = vld [vmem:[#allocation8 + $0x138] sm:$0xff]
    %v305 = vld [vmem:[#allocation8 + $0x140] sm:$0xff]
    %v306 = vld [vmem:[#allocation8 + $0x148] sm:$0xff]
    %v307 = vld [vmem:[#allocation8 + $0x150] sm:$0xff]
    %v308 = vld [vmem:[#allocation8 + $0x158] sm:$0xff]
    %v309 = vld [vmem:[#allocation8 + $0x160] sm:$0xff]
    %v310 = vld [vmem:[#allocation8 + $0x168] sm:$0xff]
    %v311 = vld [vmem:[#allocation8 + $0x170] sm:$0xff]
    %v312 = vld [vmem:[#allocation8 + $0x178] sm:$0xff]
    %v313 = vld [vmem:[#allocation8 + $0x180] sm:$0xff]
    %v314 = vld [vmem:[#allocation8 + $0x188] sm:$0xff]
    %v315 = vld [vmem:[#allocation8 + $0x190] sm:$0xff]
    %v316 = vld [vmem:[#allocation8 + $0x198] sm:$0xff]
    %v317 = vld [vmem:[#allocation8 + $0x1a0] sm:$0xff]
    %v318 = vld [vmem:[#allocation8 + $0x1a8] sm:$0xff]
    %v319 = vld [vmem:[#allocation8 + $0x1b0] sm:$0xff]
    %v320 = vld [vmem:[#allocation8 + $0x1b8] sm:$0xff]
    %v321 = vld [vmem:[#allocation8 + $0x1c0] sm:$0xff]
    %v322 = vld [vmem:[#allocation8 + $0x1c8] sm:$0xff]
    %v323 = vld [vmem:[#allocation8 + $0x1d0] sm:$0xff]
    %v324 = vld [vmem:[#allocation8 + $0x1d8] sm:$0xff]
    %v325 = vld [vmem:[#allocation8 + $0x1e0] sm:$0xff]
    %v326 = vld [vmem:[#allocation8 + $0x1e8] sm:$0xff]
    %v327 = vld [vmem:[#allocation8 + $0x1f0] sm:$0xff]
    %v328 = vld [vmem:[#allocation8 + $0x1f8] sm:$0xff]
    %v329 = vld [vmem:[%s6] sm:$0xff]
    %v331 = vlaneseq
    %v332 = vshrl.u32 %v331, 7
    %v333 = vsub.s32 0, %v332
    %v334 = vrot.slane %v329, %v333
    %v335 = vlaneseq
    %v336 = vshrl.u32 %v335, 7
    %v337 = vsub.s32 1, %v336
    %v338 = vrot.slane %v329, %v337
    %v339 = vlaneseq
    %v340 = vshrl.u32 %v339, 7
    %v341 = vsub.s32 2, %v340
    %v342 = vrot.slane %v329, %v341
    %v343 = vlaneseq
    %v344 = vshrl.u32 %v343, 7
    %v345 = vsub.s32 3, %v344
    %v346 = vrot.slane %v329, %v345
    %v347 = vlaneseq
    %v348 = vshrl.u32 %v347, 7
    %v349 = vsub.s32 4, %v348
    %v350 = vrot.slane %v329, %v349
    %v351 = vlaneseq
    %v352 = vshrl.u32 %v351, 7
    %v353 = vsub.s32 5, %v352
    %v354 = vrot.slane %v329, %v353
    %v355 = vlaneseq
    %v356 = vshrl.u32 %v355, 7
    %v357 = vsub.s32 6, %v356
    %v358 = vrot.slane %v329, %v357
    %v359 = vlaneseq
    %v360 = vshrl.u32 %v359, 7
    %v361 = vsub.s32 7, %v360
    %v362 = vrot.slane %v329, %v361
    %v435 = vunpack.c.l.b16 %v265
    %v436 = vunpack.c.h.b16 %v265
    %v437 = vunpack.c.l.b16 %v266
    %v438 = vunpack.c.h.b16 %v266
    %v439 = vunpack.c.l.b16 %v267
    %v440 = vunpack.c.h.b16 %v267
    %v441 = vunpack.c.l.b16 %v268
    %v442 = vunpack.c.h.b16 %v268
    %v443 = vunpack.c.l.b16 %v269
    %v444 = vunpack.c.h.b16 %v269
    %v445 = vunpack.c.l.b16 %v270
    %v446 = vunpack.c.h.b16 %v270
    %v447 = vunpack.c.l.b16 %v271
    %v448 = vunpack.c.h.b16 %v271
    %v449 = vunpack.c.l.b16 %v272
    %v450 = vunpack.c.h.b16 %v272
    %v451 = vunpack.c.l.b16 %v273
    %v452 = vunpack.c.h.b16 %v273
    %v453 = vunpack.c.l.b16 %v274
    %v454 = vunpack.c.h.b16 %v274
    %v455 = vunpack.c.l.b16 %v275
    %v456 = vunpack.c.h.b16 %v275
    %v457 = vunpack.c.l.b16 %v276
    %v458 = vunpack.c.h.b16 %v276
    %v459 = vunpack.c.l.b16 %v277
    %v460 = vunpack.c.h.b16 %v277
    %v461 = vunpack.c.l.b16 %v278
    %v462 = vunpack.c.h.b16 %v278
    %v463 = vunpack.c.l.b16 %v279
    %v464 = vunpack.c.h.b16 %v279
    %v465 = vunpack.c.l.b16 %v280
    %v466 = vunpack.c.h.b16 %v280
    %v467 = vunpack.c.l.b16 %v281
    %v468 = vunpack.c.h.b16 %v281
    %v469 = vunpack.c.l.b16 %v282
    %v470 = vunpack.c.h.b16 %v282
    %v471 = vunpack.c.l.b16 %v283
    %v472 = vunpack.c.h.b16 %v283
    %v473 = vunpack.c.l.b16 %v284
    %v474 = vunpack.c.h.b16 %v284
    %v475 = vunpack.c.l.b16 %v285
    %v476 = vunpack.c.h.b16 %v285
    %v477 = vunpack.c.l.b16 %v286
    %v478 = vunpack.c.h.b16 %v286
    %v479 = vunpack.c.l.b16 %v287
    %v480 = vunpack.c.h.b16 %v287
    %v481 = vunpack.c.l.b16 %v288
    %v482 = vunpack.c.h.b16 %v288
    %v483 = vunpack.c.l.b16 %v289
    %v484 = vunpack.c.h.b16 %v289
    %v485 = vunpack.c.l.b16 %v290
    %v486 = vunpack.c.h.b16 %v290
    %v487 = vunpack.c.l.b16 %v291
    %v488 = vunpack.c.h.b16 %v291
    %v489 = vunpack.c.l.b16 %v292
    %v490 = vunpack.c.h.b16 %v292
    %v491 = vunpack.c.l.b16 %v293
    %v492 = vunpack.c.h.b16 %v293
    %v493 = vunpack.c.l.b16 %v294
    %v494 = vunpack.c.h.b16 %v294
    %v495 = vunpack.c.l.b16 %v295
    %v496 = vunpack.c.h.b16 %v295
    %v497 = vunpack.c.l.b16 %v296
    %v498 = vunpack.c.h.b16 %v296
    %v499 = vunpack.c.l.b16 %v297
    %v500 = vunpack.c.h.b16 %v297
    %v501 = vunpack.c.l.b16 %v298
    %v502 = vunpack.c.h.b16 %v298
    %v503 = vunpack.c.l.b16 %v299
    %v504 = vunpack.c.h.b16 %v299
    %v505 = vunpack.c.l.b16 %v300
    %v506 = vunpack.c.h.b16 %v300
    %v507 = vunpack.c.l.b16 %v301
    %v508 = vunpack.c.h.b16 %v301
    %v509 = vunpack.c.l.b16 %v302
    %v510 = vunpack.c.h.b16 %v302
    %v511 = vunpack.c.l.b16 %v303
    %v512 = vunpack.c.h.b16 %v303
    %v513 = vunpack.c.l.b16 %v304
    %v514 = vunpack.c.h.b16 %v304
    %v515 = vunpack.c.l.b16 %v305
    %v516 = vunpack.c.h.b16 %v305
    %v517 = vunpack.c.l.b16 %v306
    %v518 = vunpack.c.h.b16 %v306
    %v519 = vunpack.c.l.b16 %v307
    %v520 = vunpack.c.h.b16 %v307
    %v521 = vunpack.c.l.b16 %v308
    %v522 = vunpack.c.h.b16 %v308
    %v523 = vunpack.c.l.b16 %v309
    %v524 = vunpack.c.h.b16 %v309
    %v525 = vunpack.c.l.b16 %v310
    %v526 = vunpack.c.h.b16 %v310
    %v527 = vunpack.c.l.b16 %v311
    %v528 = vunpack.c.h.b16 %v311
    %v529 = vunpack.c.l.b16 %v312
    %v530 = vunpack.c.h.b16 %v312
    %v531 = vunpack.c.l.b16 %v313
    %v532 = vunpack.c.h.b16 %v313
    %v533 = vunpack.c.l.b16 %v314
    %v534 = vunpack.c.h.b16 %v314
    %v535 = vunpack.c.l.b16 %v315
    %v536 = vunpack.c.h.b16 %v315
    %v537 = vunpack.c.l.b16 %v316
    %v538 = vunpack.c.h.b16 %v316
    %v539 = vunpack.c.l.b16 %v317
    %v540 = vunpack.c.h.b16 %v317
    %v541 = vunpack.c.l.b16 %v318
    %v542 = vunpack.c.h.b16 %v318
    %v543 = vunpack.c.l.b16 %v319
    %v544 = vunpack.c.h.b16 %v319
    %v545 = vunpack.c.l.b16 %v320
    %v546 = vunpack.c.h.b16 %v320
    %v547 = vunpack.c.l.b16 %v321
    %v548 = vunpack.c.h.b16 %v321
    %v549 = vunpack.c.l.b16 %v322
    %v550 = vunpack.c.h.b16 %v322
    %v551 = vunpack.c.l.b16 %v323
    %v552 = vunpack.c.h.b16 %v323
    %v553 = vunpack.c.l.b16 %v324
    %v554 = vunpack.c.h.b16 %v324
    %v555 = vunpack.c.l.b16 %v325
    %v556 = vunpack.c.h.b16 %v325
    %v557 = vunpack.c.l.b16 %v326
    %v558 = vunpack.c.h.b16 %v326
    %v559 = vunpack.c.l.b16 %v327
    %v560 = vunpack.c.h.b16 %v327
    %v561 = vunpack.c.l.b16 %v328
    %v562 = vunpack.c.h.b16 %v328
    %v563 = vpack.c.b16 %v443, %v435
    %v564 = vpack.c.b16 %v444, %v436
    %v565 = vpack.c.b16 %v445, %v437
    %v566 = vpack.c.b16 %v446, %v438
    %v567 = vpack.c.b16 %v447, %v439
    %v568 = vpack.c.b16 %v448, %v440
    %v569 = vpack.c.b16 %v449, %v441
    %v570 = vpack.c.b16 %v450, %v442
    %v571 = vpack.c.b16 %v459, %v451
    %v572 = vpack.c.b16 %v460, %v452
    %v573 = vpack.c.b16 %v461, %v453
    %v574 = vpack.c.b16 %v462, %v454
    %v575 = vpack.c.b16 %v463, %v455
    %v576 = vpack.c.b16 %v464, %v456
    %v577 = vpack.c.b16 %v465, %v457
    %v578 = vpack.c.b16 %v466, %v458
    %v579 = vpack.c.b16 %v475, %v467
    %v580 = vpack.c.b16 %v476, %v468
    %v581 = vpack.c.b16 %v477, %v469
    %v582 = vpack.c.b16 %v478, %v470
    %v583 = vpack.c.b16 %v479, %v471
    %v584 = vpack.c.b16 %v480, %v472
    %v585 = vpack.c.b16 %v481, %v473
    %v586 = vpack.c.b16 %v482, %v474
    %v587 = vpack.c.b16 %v491, %v483
    %v588 = vpack.c.b16 %v492, %v484
    %v589 = vpack.c.b16 %v493, %v485
    %v590 = vpack.c.b16 %v494, %v486
    %v591 = vpack.c.b16 %v495, %v487
    %v592 = vpack.c.b16 %v496, %v488
    %v593 = vpack.c.b16 %v497, %v489
    %v594 = vpack.c.b16 %v498, %v490
    %v595 = vpack.c.b16 %v507, %v499
    %v596 = vpack.c.b16 %v508, %v500
    %v597 = vpack.c.b16 %v509, %v501
    %v598 = vpack.c.b16 %v510, %v502
    %v599 = vpack.c.b16 %v511, %v503
    %v600 = vpack.c.b16 %v512, %v504
    %v601 = vpack.c.b16 %v513, %v505
    %v602 = vpack.c.b16 %v514, %v506
    %v603 = vpack.c.b16 %v523, %v515
    %v604 = vpack.c.b16 %v524, %v516
    %v605 = vpack.c.b16 %v525, %v517
    %v606 = vpack.c.b16 %v526, %v518
    %v607 = vpack.c.b16 %v527, %v519
    %v608 = vpack.c.b16 %v528, %v520
    %v609 = vpack.c.b16 %v529, %v521
    %v610 = vpack.c.b16 %v530, %v522
    %v611 = vpack.c.b16 %v539, %v531
    %v612 = vpack.c.b16 %v540, %v532
    %v613 = vpack.c.b16 %v541, %v533
    %v614 = vpack.c.b16 %v542, %v534
    %v615 = vpack.c.b16 %v543, %v535
    %v616 = vpack.c.b16 %v544, %v536
    %v617 = vpack.c.b16 %v545, %v537
    %v618 = vpack.c.b16 %v546, %v538
    %v619 = vpack.c.b16 %v555, %v547
    %v620 = vpack.c.b16 %v556, %v548
    %v621 = vpack.c.b16 %v557, %v549
    %v622 = vpack.c.b16 %v558, %v550
    %v623 = vpack.c.b16 %v559, %v551
    %v624 = vpack.c.b16 %v560, %v552
    %v625 = vpack.c.b16 %v561, %v553
    %v626 = vpack.c.b16 %v562, %v554
    %691 = vmatprep.subr.bf16.mxu0 %v620
    %692 = vmatpush1.bf16.msra.mxu0 %v619
    %693 = vmatprep.subr.bf16.mxu0 %v612
    %694 = vmatpush1.bf16.msra.mxu0 %v611
    %695 = vmatprep.subr.bf16.mxu0 %v604
    %696 = vmatpush1.bf16.msra.mxu0 %v603
    %697 = vmatprep.subr.bf16.mxu0 %v596
    %698 = vmatpush1.bf16.msra.mxu0 %v595
    %699 = vmatprep.subr.bf16.mxu0 %v588
    %700 = vmatpush1.bf16.msra.mxu0 %v587
    %701 = vmatprep.subr.bf16.mxu0 %v580
    %702 = vmatpush1.bf16.msra.mxu0 %v579
    %703 = vmatprep.subr.bf16.mxu0 %v572
    %704 = vmatpush1.bf16.msra.mxu0 %v571
    %705 = vmatprep.subr.bf16.mxu0 %v564
    %706 = vmatpush1.bf16.msra.mxu0 %v563
    %707 = vmatprep.subr.bf16.mxu0 0
    %708 = vmatpush2.bf16.msra.mxu0 0
    %709 = vmatprep.subr.bf16.mxu0 0
    %710 = vmatpush2.bf16.msra.mxu0 0
    %711 = vmatprep.subr.bf16.mxu0 0
    %712 = vmatpush2.bf16.msra.mxu0 0
    %713 = vmatprep.subr.bf16.mxu0 0
    %714 = vmatpush2.bf16.msra.mxu0 0
    %715 = vmatprep.subr.bf16.mxu0 0
    %716 = vmatpush2.bf16.msra.mxu0 0
    %717 = vmatprep.subr.bf16.mxu0 0
    %718 = vmatpush2.bf16.msra.mxu0 0
    %719 = vmatprep.subr.bf16.mxu0 0
    %720 = vmatpush2.bf16.msra.mxu0 0
    %721 = vmatprep.subr.bf16.mxu0 0
    %722 = vmatpush2.bf16.msra.mxu0 0
    %723 = vmatprep.mubr.bf16.mxu0 0
    %724 = vmatmul.mubr.bf16.gmra.mxu0 %v264
    %v725 = vpop.f32.mrf.mxu0
    %v726 = vadd.f32 %v334, %v725
    %v727 = vpop.f32.mrf.mxu0
    %v728 = vadd.f32 %v338, %v727
    %v729 = vpop.f32.mrf.mxu0
    %v730 = vpop.f32.mrf.mxu0
    %731 = vdwg.mxu0
    %732 = vmatprep.subr.bf16.mxu0 %v622
    %733 = vmatpush1.bf16.msra.mxu0 %v621
    %734 = vmatprep.subr.bf16.mxu0 %v614
    %735 = vmatpush1.bf16.msra.mxu0 %v613
    %736 = vmatprep.subr.bf16.mxu0 %v606
    %737 = vmatpush1.bf16.msra.mxu0 %v605
    %738 = vmatprep.subr.bf16.mxu0 %v598
    %739 = vmatpush1.bf16.msra.mxu0 %v597
    %740 = vmatprep.subr.bf16.mxu0 %v590
    %741 = vmatpush1.bf16.msra.mxu0 %v589
    %742 = vmatprep.subr.bf16.mxu0 %v582
    %743 = vmatpush1.bf16.msra.mxu0 %v581
    %744 = vmatprep.subr.bf16.mxu0 %v574
    %745 = vmatpush1.bf16.msra.mxu0 %v573
    %746 = vmatprep.subr.bf16.mxu0 %v566
    %747 = vmatpush1.bf16.msra.mxu0 %v565
    %748 = vmatprep.subr.bf16.mxu0 0
    %749 = vmatpush2.bf16.msra.mxu0 0
    %750 = vmatprep.subr.bf16.mxu0 0
    %751 = vmatpush2.bf16.msra.mxu0 0
    %752 = vmatprep.subr.bf16.mxu0 0
    %753 = vmatpush2.bf16.msra.mxu0 0
    %754 = vmatprep.subr.bf16.mxu0 0
    %755 = vmatpush2.bf16.msra.mxu0 0
    %756 = vmatprep.subr.bf16.mxu0 0
    %757 = vmatpush2.bf16.msra.mxu0 0
    %758 = vmatprep.subr.bf16.mxu0 0
    %759 = vmatpush2.bf16.msra.mxu0 0
    %760 = vmatprep.subr.bf16.mxu0 0
    %761 = vmatpush2.bf16.msra.mxu0 0
    %762 = vmatprep.subr.bf16.mxu0 0
    %763 = vmatpush2.bf16.msra.mxu0 0
    %764 = vmatprep.mubr.bf16.mxu0 0
    %765 = vmatmul.mubr.bf16.gmra.mxu0 %v264
    %v766 = vpop.f32.mrf.mxu0
    %v767 = vadd.f32 %v342, %v766
    %v768 = vpop.f32.mrf.mxu0
    %v769 = vadd.f32 %v346, %v768
    %v770 = vpop.f32.mrf.mxu0
    %v771 = vpop.f32.mrf.mxu0
    %772 = vdwg.mxu0
    %773 = vmatprep.subr.bf16.mxu0 %v624
    %774 = vmatpush1.bf16.msra.mxu0 %v623
    %775 = vmatprep.subr.bf16.mxu0 %v616
    %776 = vmatpush1.bf16.msra.mxu0 %v615
    %777 = vmatprep.subr.bf16.mxu0 %v608
    %778 = vmatpush1.bf16.msra.mxu0 %v607
    %779 = vmatprep.subr.bf16.mxu0 %v600
    %780 = vmatpush1.bf16.msra.mxu0 %v599
    %781 = vmatprep.subr.bf16.mxu0 %v592
    %782 = vmatpush1.bf16.msra.mxu0 %v591
    %783 = vmatprep.subr.bf16.mxu0 %v584
    %784 = vmatpush1.bf16.msra.mxu0 %v583
    %785 = vmatprep.subr.bf16.mxu0 %v576
    %786 = vmatpush1.bf16.msra.mxu0 %v575
    %787 = vmatprep.subr.bf16.mxu0 %v568
    %788 = vmatpush1.bf16.msra.mxu0 %v567
    %789 = vmatprep.subr.bf16.mxu0 0
    %790 = vmatpush2.bf16.msra.mxu0 0
    %791 = vmatprep.subr.bf16.mxu0 0
    %792 = vmatpush2.bf16.msra.mxu0 0
    %793 = vmatprep.subr.bf16.mxu0 0
    %794 = vmatpush2.bf16.msra.mxu0 0
    %795 = vmatprep.subr.bf16.mxu0 0
    %796 = vmatpush2.bf16.msra.mxu0 0
    %797 = vmatprep.subr.bf16.mxu0 0
    %798 = vmatpush2.bf16.msra.mxu0 0
    %799 = vmatprep.subr.bf16.mxu0 0
    %800 = vmatpush2.bf16.msra.mxu0 0
    %801 = vmatprep.subr.bf16.mxu0 0
    %802 = vmatpush2.bf16.msra.mxu0 0
    %803 = vmatprep.subr.bf16.mxu0 0
    %804 = vmatpush2.bf16.msra.mxu0 0
    %805 = vmatprep.mubr.bf16.mxu0 0
    %806 = vmatmul.mubr.bf16.gmra.mxu0 %v264
    %v807 = vpop.f32.mrf.mxu0
    %v808 = vadd.f32 %v350, %v807
    %v809 = vpop.f32.mrf.mxu0
    %v810 = vadd.f32 %v354, %v809
    %v811 = vpop.f32.mrf.mxu0
    %v812 = vpop.f32.mrf.mxu0
    %813 = vdwg.mxu0
    %814 = vmatprep.subr.bf16.mxu0 %v626
    %815 = vmatpush1.bf16.msra.mxu0 %v625
    %816 = vmatprep.subr.bf16.mxu0 %v618
    %817 = vmatpush1.bf16.msra.mxu0 %v617
    %818 = vmatprep.subr.bf16.mxu0 %v610
    %819 = vmatpush1.bf16.msra.mxu0 %v609
    %820 = vmatprep.subr.bf16.mxu0 %v602
    %821 = vmatpush1.bf16.msra.mxu0 %v601
    %822 = vmatprep.subr.bf16.mxu0 %v594
    %823 = vmatpush1.bf16.msra.mxu0 %v593
    %824 = vmatprep.subr.bf16.mxu0 %v586
    %825 = vmatpush1.bf16.msra.mxu0 %v585
    %826 = vmatprep.subr.bf16.mxu0 %v578
    %827 = vmatpush1.bf16.msra.mxu0 %v577
    %828 = vmatprep.subr.bf16.mxu0 %v570
    %829 = vmatpush1.bf16.msra.mxu0 %v569
    %830 = vmatprep.subr.bf16.mxu0 0
    %831 = vmatpush2.bf16.msra.mxu0 0
    %832 = vmatprep.subr.bf16.mxu0 0
    %833 = vmatpush2.bf16.msra.mxu0 0
    %834 = vmatprep.subr.bf16.mxu0 0
    %835 = vmatpush2.bf16.msra.mxu0 0
    %836 = vmatprep.subr.bf16.mxu0 0
    %837 = vmatpush2.bf16.msra.mxu0 0
    %838 = vmatprep.subr.bf16.mxu0 0
    %839 = vmatpush2.bf16.msra.mxu0 0
    %840 = vmatprep.subr.bf16.mxu0 0
    %841 = vmatpush2.bf16.msra.mxu0 0
    %842 = vmatprep.subr.bf16.mxu0 0
    %843 = vmatpush2.bf16.msra.mxu0 0
    %844 = vmatprep.subr.bf16.mxu0 0
    %845 = vmatpush2.bf16.msra.mxu0 0
    %846 = vmatprep.mubr.bf16.mxu0 0
    %847 = vmatmul.mubr.bf16.gmra.mxu0 %v264
    %v848 = vpop.f32.mrf.mxu0
    %v849 = vadd.f32 %v358, %v848
    %v850 = vpop.f32.mrf.mxu0
    %v851 = vadd.f32 %v362, %v850
    %v852 = vpop.f32.mrf.mxu0
    %v853 = vpop.f32.mrf.mxu0
    %854 = vdwg.mxu0
    %855 = vst [vmem:[#allocation10] sm:$0xff] %v726
    %856 = vst [vmem:[#allocation10 + $0x8] sm:$0xff] %v728
    %857 = vst [vmem:[#allocation10 + $0x10] sm:$0xff] %v767
    %858 = vst [vmem:[#allocation10 + $0x18] sm:$0xff] %v769
    %859 = vst [vmem:[#allocation10 + $0x20] sm:$0xff] %v808
    %860 = vst [vmem:[#allocation10 + $0x28] sm:$0xff] %v810
    %861 = vst [vmem:[#allocation10 + $0x30] sm:$0xff] %v849
    %862 = vst [vmem:[#allocation10 + $0x38] sm:$0xff] %v851
    // Predicated region
    $region46: #{tpu_custom_call.1} parent=1 // pred_check
      _
    $region47: #{tpu_custom_call.1} parent=1 // pred_check_branch
      %864 = sbr.rel (0) target = $region49
    $region48: #{tpu_custom_call.1} parent=1 // pred_region
      %s866 = ssub.s32 1024, 1024
      %867 = vsyncadd [#allocation4], %s866
      %s869 = sshll.u32 [#allocation10], 4
      %s870 = int_to_ptr.vmem [resolvable:$true] %s869
      %872 = dma.vmem_to_hbm [thread:$0]  %s870, 1024, %s7, [#allocation4]
    $region49: #{tpu_custom_call.1} parent=1 // pred_fallthru
      _
    // Predicated region
    $region50: #{tpu_custom_call.1} parent=1 // pred_check
      _
    $region51: #{tpu_custom_call.1} parent=1 // pred_check_branch
      %874 = sbr.rel (0) target = $region53
    $region52: #{tpu_custom_call.1} parent=1 // pred_region
      %875 = dma.done [#allocation4], 1024
    $region53: #{tpu_custom_call.1} parent=1 // pred_fallthru
      _
    %876 = vsyncpa [#allocation3], 1
    %877 = vsyncpa [#allocation6], 1
    %878 = vsyncpa [#allocation9], 1
    %879 = vsyncpa [#allocation4], 1

</llo_original>
